<compile_context>
chip_gen: v7x
topology: tpu7x:2x2x1
jax: 0.10.0
libtpu: 0.0.40
codegen_flags: <defaults>
</compile_context>

<pallas_src>
import functools
import math

import jax
import jax.numpy as jnp
from jax.experimental import pallas as pl
from jax.experimental.pallas import tpu as pltpu


# ------------------------------ hardware helpers ---------------------------- #

@functools.lru_cache(maxsize=None)
def _vmem_limit_bytes():
    """Per-generation VMEM budget: 3/4 of physical capacity, capped at 96 MiB."""
    try:
        cap = int(pltpu.get_tpu_info().vmem_capacity_bytes)
    except Exception:
        return 64 * 1024 * 1024          # conservative, known-good fallback
    return min((cap * 3) // 4, 96 * 1024 * 1024)


def _pick_tile(dim, pref, align):
    """Largest tile <= pref that divides dim and respects (8,128) alignment,
    falling back to the full dimension (always legal)."""
    if dim <= pref:
        return dim
    t = (pref // align) * align
    while t >= align:
        if dim % t == 0:
            return t
        t -= align
    return dim


# --------------------------- fused linear kernel ---------------------------- #

def _fused_linear_kernel(*refs, nk, activation, fuse_ln, has_residual, use_cache):
    it = iter(refs)
    x_ref = next(it)
    w_ref = next(it)
    b_ref = next(it)
    g_ref = bt_ref = r_ref = None
    if fuse_ln:
        g_ref = next(it)
        bt_ref = next(it)
    if has_residual:
        r_ref = next(it)
    o_ref = next(it)
    acc_ref = next(it) if nk > 1 else None
    xn_ref = next(it) if use_cache else None

    def _ln_bf16():
        x = x_ref[...].astype(jnp.float32)
        mu = jnp.mean(x, axis=-1, keepdims=True)
        var = jnp.mean(jnp.square(x - mu), axis=-1, keepdims=True)
        x = (x - mu) * jax.lax.rsqrt(var + 1e-5)
        x = x * g_ref[...] + bt_ref[...]
        return x.astype(jnp.bfloat16)

    if fuse_ln:
        if use_cache:
            # Normalize once per row-tile; reuse for every output-column tile.
            @pl.when(pl.program_id(1) == 0)
            def _():
                xn_ref[...] = _ln_bf16()
            xb = xn_ref[...]
        else:
            xb = _ln_bf16()
    else:
        xb = x_ref[...].astype(jnp.bfloat16)      # no-op if already bf16

    # bf16 inputs, f32 accumulation on the MXU.
    part = jnp.dot(xb, w_ref[...], preferred_element_type=jnp.float32)

    def _finalize(y):
        y = y + b_ref[...]
        if activation == "gelu_new":              # GPT-2 tanh GELU, f32 math
            c = math.sqrt(2.0 / math.pi)
            y3 = y * y * y                        # explicit mults, no generic pow
            y = 0.5 * y * (1.0 + jnp.tanh(c * (y + 0.044715 * y3)))
        if has_residual:
            y = y + r_ref[...].astype(jnp.float32)
        o_ref[...] = y.astype(o_ref.dtype)

    if nk == 1:
        _finalize(part)
    else:
        k = pl.program_id(2)

        @pl.when(k == 0)
        def _():
            acc_ref[...] = jnp.zeros_like(acc_ref)

        acc_ref[...] += part

        @pl.when(k == nk - 1)
        def _():
            _finalize(acc_ref[...])


def fused_linear(x, w, b, *, gamma=None, beta=None, residual=None,
                 activation=None, out_dtype=jnp.float32,
                 tm=256, tn=256, tk=512):
    """y = [residual +] act( LN(x) @ W + b ), tiled over (M, N, K).

    x: (M, K) f32/bf16, w: (K, N) bf16, b: (1, N) f32, gamma/beta: (1, K) f32.
    residual: (R, N) f32 with R | M (periodic, e.g. position embeddings) or R == M.
    """
    M, K = x.shape
    Kw, N = w.shape
    assert K == Kw
    fuse_ln = gamma is not None
    has_res = residual is not None

    R = residual.shape[0] if has_res else M
    assert M % R == 0

    tm = _pick_tile(R, tm, 8)                     # tm | R and R | M  =>  tm | M
    tn = _pick_tile(N, tn, 128)
    tk = K if fuse_ln else _pick_tile(K, tk, 128)  # LN needs the full row
    nm, nn, nk = M // tm, N // tn, K // tk
    rb = R // tm
    use_cache = fuse_ln and nn > 1

    in_specs = [
        pl.BlockSpec((tm, tk), lambda i, j, k: (i, k)),
        pl.BlockSpec((tk, tn), lambda i, j, k: (k, j)),
        pl.BlockSpec((1, tn), lambda i, j, k: (0, j)),
    ]
    args = [x, w, b]
    if fuse_ln:
        in_specs += [pl.BlockSpec((1, tk), lambda i, j, k: (0, k)),
                     pl.BlockSpec((1, tk), lambda i, j, k: (0, k))]
        args += [gamma, beta]
    if has_res:
        in_specs += [pl.BlockSpec((tm, tn), lambda i, j, k, rb=rb: (i % rb, j))]
        args += [residual]

    scratch = []
    if nk > 1:
        scratch.append(pltpu.VMEM((tm, tn), jnp.float32))
    if use_cache:
        scratch.append(pltpu.VMEM((tm, tk), jnp.bfloat16))

    kernel = functools.partial(_fused_linear_kernel, nk=nk, activation=activation,
                               fuse_ln=fuse_ln, has_residual=has_res,
                               use_cache=use_cache)

    # The LN cache is only valid if each core sweeps j for a fixed i, so demote j
    # to "arbitrary" in that case; otherwise both M/N axes can shard across cores.
    dims = ("parallel", "arbitrary" if use_cache else "parallel", "arbitrary")

    return pl.pallas_call(
        kernel,
        out_shape=jax.ShapeDtypeStruct((M, N), out_dtype),
        grid=(nm, nn, nk),
        in_specs=in_specs,
        out_specs=pl.BlockSpec((tm, tn), lambda i, j, k: (i, j)),
        scratch_shapes=scratch,
        compiler_params=pltpu.CompilerParams(
            dimension_semantics=dims,
            vmem_limit_bytes=_vmem_limit_bytes()),
    )(*args)


# ----------------------------- attention kernel ----------------------------- #

def _attn_kernel(qkv_ref, mask_ref, o_ref, *, n_head, d_head, tq):
    E = n_head * d_head
    scale = 1.0 / math.sqrt(d_head)

    qkv2 = qkv_ref.at[0]                              # view: (T, 3E) bf16
    kv = qkv2[...]                                    # full K/V rows, bf16
    q0 = pl.multiple_of(pl.program_id(1) * tq, 8)
    q_rows = qkv2[pl.ds(q0, tq), :]                   # (tq, 3E) query-row tile
    bias = mask_ref[...]                              # (tq, T) f32 additive causal bias

    outs = []
    for h in range(n_head):                           # static loop: all heads per step
        lo = h * d_head
        q = q_rows[:, lo:lo + d_head]
        k = kv[:, E + lo:E + lo + d_head]
        v = kv[:, 2 * E + lo:2 * E + lo + d_head]

        # MXU contraction over Dh — no in-kernel transpose; f32 softmax math.
        s = jax.lax.dot_general(q, k, (((1,), (1,)), ((), ())),
                                preferred_element_type=jnp.float32)
        s = s * scale + bias
        m = jnp.max(s, axis=-1, keepdims=True)
        p = jnp.exp(s - m)
        # approx reciprocal on the EUP (~1e-3 rel err vs exact divide).
        p = p * pl.reciprocal(jnp.sum(p, axis=-1, keepdims=True), approx=True)
        outs.append(jnp.dot(p.astype(jnp.bfloat16), v,
                            preferred_element_type=jnp.float32))

    # One full-width, head-interleaved store -> output tile is (tq, E) bf16.
    # TODO(synk): for large T on v7x switch to KV-tiled flash-style online softmax
    # and lane-dense per-head blocks instead of d_head-wide value slices.
    o_ref[0] = jnp.concatenate(outs, axis=-1).astype(o_ref.dtype)


def causal_attention(qkv, mask, n_head, *, tq_pref=256):
    """qkv: (B, T, 3E) bf16, mask: (T, T) f32 additive bias -> ctx (B, T, E) bf16."""
    B, T, threeE = qkv.shape
    E = threeE // 3
    d_head = E // n_head
    tq = _pick_tile(T, tq_pref, 8)
    nq = T // tq

    kernel = functools.partial(_attn_kernel, n_head=n_head, d_head=d_head, tq=tq)
    return pl.pallas_call(
        kernel,
        out_shape=jax.ShapeDtypeStruct((B, T, E), jnp.bfloat16),
        grid=(B, nq),
        in_specs=[pl.BlockSpec((1, T, threeE), lambda b, qi: (b, 0, 0)),
                  pl.BlockSpec((tq, T), lambda b, qi: (qi, 0))],
        out_specs=pl.BlockSpec((1, tq, E), lambda b, qi: (b, qi, 0)),
        compiler_params=pltpu.CompilerParams(
            dimension_semantics=("parallel", "parallel"),
            vmem_limit_bytes=_vmem_limit_bytes()),
    )(qkv, mask)


# --------------------------- parameter construction ------------------------- #

def init_params(key, n_dims, n_positions, n_embd, n_layer, n_head):
    def w_init(k, shape, std=0.02):
        return (std * jax.random.normal(k, shape)).astype(jnp.bfloat16)

    keys = iter(jax.random.split(key, 8 + 6 * n_layer))
    n_out_pad = max(128, ((n_dims + 127) // 128) * 128)   # lane-dense read_out head

    read_out_w = jnp.zeros((n_embd, n_out_pad), jnp.bfloat16)
    read_out_w = read_out_w.at[:, :n_dims].set(w_init(next(keys), (n_embd, n_dims)))

    p = {
        "n_dims": n_dims,
        "read_in_w": w_init(next(keys), (n_dims, n_embd)),
        "read_in_b": jnp.zeros((1, n_embd), jnp.float32),
        "wpe": (0.02 * jax.random.normal(next(keys), (2 * n_positions, n_embd))
                ).astype(jnp.float32),
        "ln_f_g": jnp.ones((1, n_embd), jnp.float32),
        "ln_f_b": jnp.zeros((1, n_embd), jnp.float32),
        "read_out_w": read_out_w,
        "read_out_b": jnp.zeros((1, n_out_pad), jnp.float32),
        "layers": [],
    }
    for _ in range(n_layer):
        p["layers"].append({
            "ln1_g": jnp.ones((1, n_embd), jnp.float32),
            "ln1_b": jnp.zeros((1, n_embd), jnp.float32),
            "attn_w": w_init(next(keys), (n_embd, 3 * n_embd)),   # GPT-2 Conv1D: x @ W + b
            "attn_b": jnp.zeros((1, 3 * n_embd), jnp.float32),
            "attn_proj_w": w_init(next(keys), (n_embd, n_embd)),
            "attn_proj_b": jnp.zeros((1, n_embd), jnp.float32),
            "ln2_g": jnp.ones((1, n_embd), jnp.float32),
            "ln2_b": jnp.zeros((1, n_embd), jnp.float32),
            "fc_w": w_init(next(keys), (n_embd, 4 * n_embd)),
            "fc_b": jnp.zeros((1, 4 * n_embd), jnp.float32),
            "proj_w": w_init(next(keys), (4 * n_embd, n_embd)),
            "proj_b": jnp.zeros((1, n_embd), jnp.float32),
        })
    return p


# ------------------------------- forward pass -------------------------------- #

def combine_xy(xs, ys):
    """xs: (B, N, n_dim), ys: (B, N, out_dim) -> (B, 2N, max(n_dim, out_dim))."""
    B, N, n_dim = xs.shape
    out_dim = ys.shape[2]
    d = max(n_dim, out_dim)
    if n_dim < d:
        xs = jnp.concatenate([xs, jnp.zeros((B, N, d - n_dim), xs.dtype)], axis=2)
    if out_dim < d:
        ys = jnp.concatenate([ys, jnp.zeros((B, N, d - out_dim), ys.dtype)], axis=2)
    return jnp.concatenate([xs, ys], axis=2).reshape(B, 2 * N, d)


def gpt2_block(h2d, lp, n_head, mask, B, T):
    E = h2d.shape[1]
    # LN1 + fused QKV projection; QKV intermediate written as bf16.
    qkv = fused_linear(h2d, lp["attn_w"], lp["attn_b"],
                       gamma=lp["ln1_g"], beta=lp["ln1_b"],
                       out_dtype=jnp.bfloat16)                       # (M, 3E) bf16
    # All heads per (batch, query-tile) step, read directly from (B, T, 3E).
    ctx = causal_attention(qkv.reshape(B, T, 3 * E), mask, n_head)   # (B, T, E) bf16
    # Attention output projection with fused residual add (residual stream f32).
    h2d = fused_linear(ctx.reshape(B * T, E), lp["attn_proj_w"], lp["attn_proj_b"],
                       residual=h2d)
    # LN2 + fc + GELU fused; 4E-wide intermediate written as bf16.
    x = fused_linear(h2d, lp["fc_w"], lp["fc_b"],
                     gamma=lp["ln2_g"], beta=lp["ln2_b"], activation="gelu_new",
                     out_dtype=jnp.bfloat16)
    # MLP output projection with fused residual add.
    h2d = fused_linear(x, lp["proj_w"], lp["proj_b"], residual=h2d)
    return h2d


def transformer_forward(params, xs, ys, n_head):
    xy = combine_xy(xs, ys)                                          # (B, 2N, D)
    B, T, D = xy.shape
    E = params["read_in_w"].shape[1]
    wpe = params["wpe"][:T]                                          # (T, E) f32

    if T % 8 == 0 or B == 1:
        # Position-embedding add fused into the read_in epilogue (periodic residual).
        h2d = fused_linear(xy.reshape(B * T, D), params["read_in_w"],
                           params["read_in_b"], residual=wpe)
    else:
        h2d = fused_linear(xy.reshape(B * T, D), params["read_in_w"],
                           params["read_in_b"])
        h2d = h2d + jnp.tile(wpe, (B, 1))

    # Precompute the causal additive bias once per forward (resident in the kernel).
    row = jax.lax.broadcasted_iota(jnp.int32, (T, T), 0)
    col = jax.lax.broadcasted_iota(jnp.int32, (T, T), 1)
    mask = jnp.where(col <= row, 0.0, -1e30).astype(jnp.float32)

    for lp in params["layers"]:
        h2d = gpt2_block(h2d, lp, n_head, mask, B, T)

    # read_out only on the x-positions (even rows): halves the final matmul work
    # and makes the original pred[:, ::2, :] slice unnecessary.
    n_dims = params["n_dims"]
    h_x = h2d.reshape(B, T, E)[:, ::2, :].reshape(B * (T // 2), E)
    out = fused_linear(h_x, params["read_out_w"], params["read_out_b"],
                       gamma=params["ln_f_g"], beta=params["ln_f_b"])
    return out[:, :n_dims].reshape(B, T // 2, n_dims)


# ----------------------------------- main ------------------------------------ #

if __name__ == "__main__":
    n_dims, n_positions = 4, 8
    n_embd, n_layer, n_head = 32, 2, 4
    B, N = 2, n_positions

    key = jax.random.PRNGKey(0)
    k_params, k_xs, k_ys = jax.random.split(key, 3)
    params = init_params(k_params, n_dims, n_positions, n_embd, n_layer, n_head)

    xs = jax.random.normal(k_xs, (B, N, n_dims), dtype=jnp.float32)
    ys = jax.random.normal(k_ys, (B, N, 1), dtype=jnp.float32)

    out = transformer_forward(params, xs, ys, n_head)
    out = jax.block_until_ready(out)
    assert out.shape == (B, N, n_dims), out.shape
    print("KERNEL_OK")
</pallas_src>

<mosaic_0001>
module attributes {stable_mosaic.version = 11 : i64} {
  func.func @_fused_linear_kernel(%arg0: i32, %arg1: i32, %arg2: i32, %arg3: memref<16x4xf32, #tpu.memory_space<vmem>>, %arg4: memref<4x32xbf16, #tpu.memory_space<vmem>>, %arg5: memref<1x32xf32, #tpu.memory_space<vmem>>, %arg6: memref<16x32xf32, #tpu.memory_space<vmem>>, %arg7: memref<16x32xf32, #tpu.memory_space<vmem>>) attributes {dimension_semantics = [#tpu.dimension_semantics<parallel>, #tpu.dimension_semantics<parallel>, #tpu.dimension_semantics<arbitrary>], iteration_bounds = array<i64: 2, 1, 1>, scalar_prefetch = 0 : i64, scratch_operands = 0 : i64, tpu.core_type = #tpu.core_type<tc>, window_params = [{transform_indices = @transform_0, window_bounds = array<i64: 16, 4>}, {transform_indices = @transform_1, window_bounds = array<i64: 4, 32>}, {transform_indices = @transform_2, window_bounds = array<i64: 1, 32>}, {transform_indices = @transform_3, window_bounds = array<i64: 16, 32>}, {transform_indices = @transform_4, window_bounds = array<i64: 16, 32>}]} {
    %c0 = arith.constant 0 : index
    %c0_0 = arith.constant 0 : index
    %0 = vector.load %arg3[%c0, %c0_0] : memref<16x4xf32, #tpu.memory_space<vmem>>, vector<16x4xf32>
    %1 = arith.truncf %0 : vector<16x4xf32> to vector<16x4xbf16>
    %c0_1 = arith.constant 0 : index
    %c0_2 = arith.constant 0 : index
    %2 = vector.load %arg4[%c0_1, %c0_2] : memref<4x32xbf16, #tpu.memory_space<vmem>>, vector<4x32xbf16>
    %cst = arith.constant dense<0.000000e+00> : vector<16x32xf32>
    %3 = tpu.matmul %1, %2, %cst {dimension_numbers = #tpu.dot_dimension_numbers<[1], [0], [0], [1], [0, 0, 1, 1], [], []>} : vector<16x4xbf16>, vector<4x32xbf16>, vector<16x32xf32> -> vector<16x32xf32>
    %c0_3 = arith.constant 0 : index
    %c0_4 = arith.constant 0 : index
    %4 = vector.load %arg5[%c0_3, %c0_4] : memref<1x32xf32, #tpu.memory_space<vmem>>, vector<1x32xf32>
    %5 = vector.broadcast %4 : vector<1x32xf32> to vector<16x32xf32>
    %6 = arith.addf %3, %5 : vector<16x32xf32>
    %c0_5 = arith.constant 0 : index
    %c0_6 = arith.constant 0 : index
    %7 = vector.load %arg6[%c0_5, %c0_6] : memref<16x32xf32, #tpu.memory_space<vmem>>, vector<16x32xf32>
    %8 = arith.addf %6, %7 : vector<16x32xf32>
    %c0_7 = arith.constant 0 : index
    %c0_8 = arith.constant 0 : index
    %9 = vector.load %arg7[%c0_7, %c0_8] : memref<16x32xf32, #tpu.memory_space<vmem>>, vector<16x32xf32>
    tpu.vector_store %arg7[%c0_7, %c0_8], %8 {strides = array<i32>} : memref<16x32xf32, #tpu.memory_space<vmem>>, vector<16x32xf32>,
    return
  }
  func.func @transform_0(%arg0: i32, %arg1: i32, %arg2: i32) -> (i32, i32) {
    %c0_i32 = arith.constant 0 : i32
    return %arg0, %arg2 : i32, i32
  }
  func.func @transform_1(%arg0: i32, %arg1: i32, %arg2: i32) -> (i32, i32) {
    %c0_i32 = arith.constant 0 : i32
    return %arg2, %arg1 : i32, i32
  }
  func.func @transform_2(%arg0: i32, %arg1: i32, %arg2: i32) -> (i32, i32) {
    %c0_i32 = arith.constant 0 : i32
    %c0_i32_0 = arith.constant 0 : i32
    return %c0_i32, %arg1 : i32, i32
  }
  func.func @transform_3(%arg0: i32, %arg1: i32, %arg2: i32) -> (i32, i32) {
    %c1_i32 = arith.constant 1 : i32
    %c0_i32 = arith.constant 0 : i32
    %0 = arith.cmpi eq, %c1_i32, %c0_i32 : i32
    %c1_i32_0 = arith.constant 1 : i32
    %1 = arith.select %0, %c1_i32_0, %c1_i32 : i32
    %2 = arith.remsi %arg0, %1 : i32
    %c0_i32_1 = arith.constant 0 : i32
    %3 = arith.cmpi ne, %2, %c0_i32_1 : i32
    %c0_i32_2 = arith.constant 0 : i32
    %4 = arith.cmpi slt, %2, %c0_i32_2 : i32
    %c0_i32_3 = arith.constant 0 : i32
    %5 = arith.cmpi slt, %1, %c0_i32_3 : i32
    %6 = arith.xori %4, %5 : i1
    %7 = arith.andi %6, %3 : i1
    %8 = arith.addi %2, %1 : i32
    %9 = arith.select %7, %8, %2 : i32
    %c0_i32_4 = arith.constant 0 : i32
    return %9, %arg1 : i32, i32
  }
  func.func @transform_4(%arg0: i32, %arg1: i32, %arg2: i32) -> (i32, i32) {
    %c0_i32 = arith.constant 0 : i32
    return %arg0, %arg1 : i32, i32
  }
}

</mosaic_0001>

<llo_original>
// kernel: tpu_custom_call.1
$region0: #{tpu_custom_call.1}
  #allocation0 [shape = 'u32[]', space=smem, size = 0x4, offset = 0x4, fixed_abs, tag = 'smem constant byte address 0x4 - core index']
  #allocation1 [shape = 'u32[144,128]{1,0:T(1,128)}', space=vmem, size = 0x12000, scoped, tag = 'internal scratch']
  %s0 = inlined_call_operand.hbm [shape: f32[32,4], index: 0, kind: input, shape index: {}]
  %s1 = inlined_call_operand.hbm [shape: bf16[4,32], index: 1, kind: input, shape index: {}]
  %s2 = inlined_call_operand.hbm [shape: f32[1,32], index: 2, kind: input, shape index: {}]
  %s3 = inlined_call_operand.hbm [shape: f32[16,32], index: 3, kind: input, shape index: {}]
  %s4 = inlined_call_operand.hbm [shape: f32[32,32], index: 4, kind: output, shape index: {}]
  %s5 = sld [smem:[#allocation0]]
  $region65: #{tpu_custom_call.1} parent=0
    _
  %s7 = ssub.s32 1, %s5
  %s8 = scalar_select 0, %s7, %s5
  $region1: #{tpu_custom_call.1} parent=0
    #allocation2 [shape = 'u8[16384]{0}', space=vmem, size = 0x4000, scoped, tag = 'input window, operand 0']
    #allocation3 [shape = 's32[2]{0}', space=sflag, size = 0x8, scoped, tag = 'scoped memory for tpu_custom_call.1']
    #allocation4 [shape = 's32[2]{0}', space=sflag, size = 0x8, scoped, tag = 'scoped memory for tpu_custom_call.1']
    #allocation5 [shape = 'u8[1024]{0}', space=vmem, size = 0x400, scoped, tag = 'input window, operand 1, single buffered']
    #allocation6 [shape = 's32[1]{0}', space=sflag, size = 0x4, scoped, tag = 'scoped memory for tpu_custom_call.1']
    #allocation7 [shape = 'u8[512]{0}', space=vmem, size = 0x400, scoped, tag = 'input window, operand 2, single buffered']
    #allocation8 [shape = 'u8[8192]{0}', space=vmem, size = 0x2000, scoped, tag = 'input window, operand 3, single buffered']
    #allocation9 [shape = 's32[1]{0}', space=sflag, size = 0x4, scoped, tag = 'scoped memory for tpu_custom_call.1']
    #allocation10 [shape = 'u8[16384]{0}', space=vmem, size = 0x4000, scoped, tag = 'output window, operand 0']
    %9 = vsyncpa [#allocation3], 0
    %s10 = scalar_lea.sflag [#allocation3], 1
    %11 = vsyncpa %s10, 0
    %12 = vsyncpa [#allocation6], 0
    %13 = vsyncpa [#allocation9], 0
    %14 = vsyncpa [#allocation4], 0
    %s15 = scalar_lea.sflag [#allocation4], 1
    %16 = vsyncpa %s15, 0
    loop: start=0, step=1, limit=4
    $region2: #{tpu_custom_call.1} parent=1 // loop_pre_header
      _
    $region3: #{tpu_custom_call.1} parent=1 // loop_header
      %s18 = sphi 0, %s22
      %p19 = scmp.ge.s32.totalorder %s18, 4
      %s25 = sphi 0, %s44
      %s26 = sphi 0, %s40
      %s27 = sphi 0, %s36
      %s28 = sphi 0, %s25
      %s29 = sphi 0, %s26
      %s30 = sphi 0, %s27
      %s31 = sphi 0, %s28
      %s32 = sphi 0, %s29
      %s33 = sphi 0, %s30
      %s49 = sphi 0, %s51
      %s52 = sphi 0, %s49
      %s53 = sphi 0, %s52
      %s69 = sphi 0, %s53
      %s77 = sphi 0, %s79
      %s80 = sphi 0, %s77
      %s81 = sphi 0, %s80
      %s97 = sphi 0, %s81
      %s103 = sphi 0, %s105
      %s106 = sphi 0, %s103
      %s107 = sphi 0, %s106
      %s123 = sphi 0, %s107
      %s129 = sphi 0, %s131
      %s132 = sphi 0, %s129
      %s133 = sphi 0, %s132
      %s149 = sphi 0, %s133
      %s157 = sphi 0, %s159
      %s160 = sphi 0, %s157
      %s161 = sphi 0, %s160
      %s177 = sphi 0, %s161
    $region4: #{tpu_custom_call.1} parent=1 // loop_header_branch
      %21 = sbr.rel (%p19) target = $region8
    $region5: #{tpu_custom_call.1} parent=1 // loop_body
      %s23 = ssub.s32 %s18, 1
      %s24 = ssub.s32 %s18, 2
      %s34 = sadd.s32 1, %s27
      %p35 = scmp.ge.s32.totalorder %s34, 1
      %s36 = scalar_select %p35, 0, %s34
      %s37 = sadd.s32 1, %s26
      %s38 = scalar_select %p35, %s37, %s26
      %p39 = scmp.ge.s32.totalorder %s38, 1
      %s40 = scalar_select %p39, 0, %s38
      %s41 = sadd.s32 1, %s25
      %s42 = scalar_select %p39, %s41, %s25
      %p43 = scmp.ge.s32.totalorder %s42, 2
      %s44 = scalar_select %p43, 0, %s42
      %s45 = ssub.s32 %s25, %s44
      %s46 = ssub.s32 %s27, %s36
      %s47 = sor.u32 %s45, %s46
      %p48 = scmp.eq.s32.totalorder %s47, 0
      %s50 = sadd.s32 %s49, 1
      %s51 = scalar_select %p48, %s49, %s50
      %p54 = pneg %p48
      %p55 = scmp.eq.s32.totalorder %s18, 1
      %p56 = por %p54, %p55
      %p57 = scmp.ne.s32.totalorder %s49, %s52
      %p58 = scmp.eq.s32.totalorder %s18, 0
      %p59 = por %p57, %p58
      %p60 = scmp.ne.s32.totalorder %s49, %s52
      %p61 = scmp.eq.s32.totalorder %s23, 1
      %p62 = por %p60, %p61
      %p63 = scmp.ne.s32.totalorder %s52, %s53
      %p64 = scmp.eq.s32.totalorder %s23, 0
      %p65 = por %p63, %p64
      %p66 = scmp.ne.s32.totalorder %s52, %s53
      %p67 = scmp.eq.s32.totalorder %s24, 1
      %p68 = por %p66, %p67
      %p70 = scmp.ne.s32.totalorder %s53, %s69
      %p71 = scmp.eq.s32.totalorder %s24, 0
      %p72 = por %p70, %p71
      %s73 = ssub.s32 %s27, %s36
      %s74 = ssub.s32 %s26, %s40
      %s75 = sor.u32 %s73, %s74
      %p76 = scmp.eq.s32.totalorder %s75, 0
      %s78 = sadd.s32 %s77, 1
      %s79 = scalar_select %p76, %s77, %s78
      %p82 = pneg %p76
      %p83 = scmp.eq.s32.totalorder %s18, 1
      %p84 = por %p82, %p83
      %p85 = scmp.ne.s32.totalorder %s77, %s80
      %p86 = scmp.eq.s32.totalorder %s18, 0
      %p87 = por %p85, %p86
      %p88 = scmp.ne.s32.totalorder %s77, %s80
      %p89 = scmp.eq.s32.totalorder %s23, 1
      %p90 = por %p88, %p89
      %p91 = scmp.ne.s32.totalorder %s80, %s81
      %p92 = scmp.eq.s32.totalorder %s23, 0
      %p93 = por %p91, %p92
      %p94 = scmp.ne.s32.totalorder %s80, %s81
      %p95 = scmp.eq.s32.totalorder %s24, 1
      %p96 = por %p94, %p95
      %p98 = scmp.ne.s32.totalorder %s81, %s97
      %p99 = scmp.eq.s32.totalorder %s24, 0
      %p100 = por %p98, %p99
      %s101 = ssub.s32 %s26, %s40
      %p102 = scmp.eq.s32.totalorder %s101, 0
      %s104 = sadd.s32 %s103, 1
      %s105 = scalar_select %p102, %s103, %s104
      %p108 = pneg %p102
      %p109 = scmp.eq.s32.totalorder %s18, 1
      %p110 = por %p108, %p109
      %p111 = scmp.ne.s32.totalorder %s103, %s106
      %p112 = scmp.eq.s32.totalorder %s18, 0
      %p113 = por %p111, %p112
      %p114 = scmp.ne.s32.totalorder %s103, %s106
      %p115 = scmp.eq.s32.totalorder %s23, 1
      %p116 = por %p114, %p115
      %p117 = scmp.ne.s32.totalorder %s106, %s107
      %p118 = scmp.eq.s32.totalorder %s23, 0
      %p119 = por %p117, %p118
      %p120 = scmp.ne.s32.totalorder %s106, %s107
      %p121 = scmp.eq.s32.totalorder %s24, 1
      %p122 = por %p120, %p121
      %p124 = scmp.ne.s32.totalorder %s107, %s123
      %p125 = scmp.eq.s32.totalorder %s24, 0
      %p126 = por %p124, %p125
      %s127 = ssub.s32 %s26, %s40
      %p128 = scmp.eq.s32.totalorder %s127, 0
      %s130 = sadd.s32 %s129, 1
      %s131 = scalar_select %p128, %s129, %s130
      %p134 = pneg %p128
      %p135 = scmp.eq.s32.totalorder %s18, 1
      %p136 = por %p134, %p135
      %p137 = scmp.ne.s32.totalorder %s129, %s132
      %p138 = scmp.eq.s32.totalorder %s18, 0
      %p139 = por %p137, %p138
      %p140 = scmp.ne.s32.totalorder %s129, %s132
      %p141 = scmp.eq.s32.totalorder %s23, 1
      %p142 = por %p140, %p141
      %p143 = scmp.ne.s32.totalorder %s132, %s133
      %p144 = scmp.eq.s32.totalorder %s23, 0
      %p145 = por %p143, %p144
      %p146 = scmp.ne.s32.totalorder %s132, %s133
      %p147 = scmp.eq.s32.totalorder %s24, 1
      %p148 = por %p146, %p147
      %p150 = scmp.ne.s32.totalorder %s133, %s149
      %p151 = scmp.eq.s32.totalorder %s24, 0
      %p152 = por %p150, %p151
      %s153 = ssub.s32 %s25, %s44
      %s154 = ssub.s32 %s26, %s40
      %s155 = sor.u32 %s153, %s154
      %p156 = scmp.eq.s32.totalorder %s155, 0
      %s158 = sadd.s32 %s157, 1
      %s159 = scalar_select %p156, %s157, %s158
      %p162 = pneg %p156
      %p163 = scmp.eq.s32.totalorder %s18, 1
      %p164 = por %p162, %p163
      %p165 = scmp.ne.s32.totalorder %s157, %s160
      %p166 = scmp.eq.s32.totalorder %s18, 0
      %p167 = por %p165, %p166
      %p168 = scmp.ne.s32.totalorder %s157, %s160
      %p169 = scmp.eq.s32.totalorder %s23, 1
      %p170 = por %p168, %p169
      %p171 = scmp.ne.s32.totalorder %s160, %s161
      %p172 = scmp.eq.s32.totalorder %s23, 0
      %p173 = por %p171, %p172
      %p174 = scmp.ne.s32.totalorder %s160, %s161
      %p175 = scmp.eq.s32.totalorder %s24, 1
      %p176 = por %p174, %p175
      %p178 = scmp.ne.s32.totalorder %s161, %s177
      %p179 = scmp.eq.s32.totalorder %s24, 0
      %p180 = por %p178, %p179
      %p181 = scmp.le.s32.totalorder 1, %s18
      %p182 = scmp.lt.s32.totalorder %s18, 3
      %p183 = pnand %p181, %p182
      %p184 = pneg %p183
      // Predicated region
      $region9: #{tpu_custom_call.1} parent=5 // pred_check
        _
      $region10: #{tpu_custom_call.1} parent=5 // pred_check_branch
        %186 = sbr.rel (%p183) target = $region12
      $region11: #{tpu_custom_call.1} parent=5 // pred_region
        %s187 = ssub.s32 %s18, 1
        // Predicated region
        $region13: #{tpu_custom_call.1} parent=11 // pred_check
          %p188 = pneg %p93
        $region14: #{tpu_custom_call.1} parent=11 // pred_check_branch
          %190 = sbr.rel (%p188) target = $region16
        $region15: #{tpu_custom_call.1} parent=11 // pred_region
          %s192 = ssub.s32 32, 32
          %193 = vsyncadd [#allocation6], %s192
          %s194 = sadd.s32 %s29, %s30
          %s195 = smul.addr %s194, 32
          %s196 = scalar_lea.hbm %s1, %s195
          %s198 = sshll.u32 [#allocation5], 4
          %s199 = int_to_ptr.vmem [resolvable:$true] %s198
          %201 = dma.hbm_to_vmem [thread:$0]  %s196, 32, %s199, [#allocation6]
        $region16: #{tpu_custom_call.1} parent=11 // pred_fallthru
          _
        // Predicated region
        $region17: #{tpu_custom_call.1} parent=11 // pred_check
          %p202 = pneg %p119
        $region18: #{tpu_custom_call.1} parent=11 // pred_check_branch
          %204 = sbr.rel (%p202) target = $region20
        $region19: #{tpu_custom_call.1} parent=11 // pred_region
          %s206 = ssub.s32 16, 16
          %207 = vsyncadd [#allocation6], %s206
          %s208 = smul.addr %s29, 16
          %s209 = scalar_lea.hbm %s2, %s208
          %s211 = sshll.u32 [#allocation7], 4
          %s212 = int_to_ptr.vmem [resolvable:$true] %s211
          %214 = dma.hbm_to_vmem [thread:$0]  %s209, 16, %s212, [#allocation6]
        $region20: #{tpu_custom_call.1} parent=11 // pred_fallthru
          _
        // Predicated region
        $region21: #{tpu_custom_call.1} parent=11 // pred_check
          %p215 = pneg %p145
        $region22: #{tpu_custom_call.1} parent=11 // pred_check_branch
          %217 = sbr.rel (%p215) target = $region24
        $region23: #{tpu_custom_call.1} parent=11 // pred_region
          %s219 = ssub.s32 256, 256
          %220 = vsyncadd [#allocation9], %s219
          %s221 = smul.addr %s29, 128
          %s222 = scalar_lea.hbm %s3, %s221
          %s223 = sshll.u32 [#allocation8], 4
          %s224 = int_to_ptr.vmem [resolvable:$true] %s223
          %229 = dma.hbm_to_vmem [thread:$0]  %s222, 256, %s224, [#allocation9], 128, 128, 8
        $region24: #{tpu_custom_call.1} parent=11 // pred_fallthru
          _
      $region12: #{tpu_custom_call.1} parent=5 // pred_fallthru
        _
      %p230 = scmp.lt.s32.totalorder %s18, 2
      // Predicated region
      $region25: #{tpu_custom_call.1} parent=5 // pred_check
        %p231 = pneg %p230
      $region26: #{tpu_custom_call.1} parent=5 // pred_check_branch
        %233 = sbr.rel (%p231) target = $region28
      $region27: #{tpu_custom_call.1} parent=5 // pred_region
        // Predicated region
        $region29: #{tpu_custom_call.1} parent=27 // pred_check
          %p234 = pneg %p59
        $region30: #{tpu_custom_call.1} parent=27 // pred_check_branch
          %236 = sbr.rel (%p234) target = $region32
        $region31: #{tpu_custom_call.1} parent=27 // pred_region
          %s237 = sand.u32 %s49, 1
          %s238 = scalar_lea.sflag [#allocation3], %s237
          %s239 = sand.u32 %s49, 1
          %s240 = smul.addr %s239, 16
          %s241 = scalar_lea.vmem [#allocation2], %s240
          %s242 = smul.u32 2, %s25
          %s244 = ssub.s32 256, 256
          %245 = vsyncadd %s238, %s244
          %s246 = sadd.s32 %s27, %s242
          %s247 = smul.addr %s246, 128
          %s248 = scalar_lea.hbm %s0, %s247
          %s249 = sshll.u32 %s241, 4
          %s250 = int_to_ptr.vmem [resolvable:$true] %s249
          %255 = dma.hbm_to_vmem [thread:$0]  %s248, 256, %s250, %s238, 128, 128, 8
        $region32: #{tpu_custom_call.1} parent=27 // pred_fallthru
          _
      $region28: #{tpu_custom_call.1} parent=5 // pred_fallthru
        _
      %p256 = scmp.le.s32.totalorder 1, %s18
      %p257 = scmp.lt.s32.totalorder %s18, 3
      %p258 = pnand %p256, %p257
      %p259 = pneg %p258
      // Predicated region
      $region33: #{tpu_custom_call.1} parent=5 // pred_check
        _
      $region34: #{tpu_custom_call.1} parent=5 // pred_check_branch
        %261 = sbr.rel (%p258) target = $region36
      $region35: #{tpu_custom_call.1} parent=5 // pred_region
        %s262 = ssub.s32 %s18, 1
        %s263 = sand.u32 %s52, 1
        %s264 = scalar_lea.sflag [#allocation3], %s263
        %s265 = sand.u32 %s52, 1
        %s266 = smul.addr %s265, 16
        %s267 = scalar_lea.vmem [#allocation2], %s266
        // Predicated region
        $region37: #{tpu_custom_call.1} parent=35 // pred_check
          %p268 = pneg %p65
        $region38: #{tpu_custom_call.1} parent=35 // pred_check_branch
          %270 = sbr.rel (%p268) target = $region40
        $region39: #{tpu_custom_call.1} parent=35 // pred_region
          %271 = dma.done %s264, 256
        $region40: #{tpu_custom_call.1} parent=35 // pred_fallthru
          _
        // Predicated region
        $region41: #{tpu_custom_call.1} parent=35 // pred_check
          %p272 = pneg %p93
        $region42: #{tpu_custom_call.1} parent=35 // pred_check_branch
          %274 = sbr.rel (%p272) target = $region44
        $region43: #{tpu_custom_call.1} parent=35 // pred_region
          %275 = dma.done [#allocation6], 32
        $region44: #{tpu_custom_call.1} parent=35 // pred_fallthru
          _
        // Predicated region
        $region45: #{tpu_custom_call.1} parent=35 // pred_check
          %p276 = pneg %p119
        $region46: #{tpu_custom_call.1} parent=35 // pred_check_branch
          %278 = sbr.rel (%p276) target = $region48
        $region47: #{tpu_custom_call.1} parent=35 // pred_region
          %279 = dma.done [#allocation6], 16
        $region48: #{tpu_custom_call.1} parent=35 // pred_fallthru
          _
        // Predicated region
        $region49: #{tpu_custom_call.1} parent=35 // pred_check
          %p280 = pneg %p145
        $region50: #{tpu_custom_call.1} parent=35 // pred_check_branch
          %282 = sbr.rel (%p280) target = $region52
        $region51: #{tpu_custom_call.1} parent=35 // pred_region
          %283 = dma.done [#allocation9], 256
        $region52: #{tpu_custom_call.1} parent=35 // pred_fallthru
          _
        %s284 = sand.u32 %s52, 1
        %s285 = scalar_lea.sflag [#allocation3], %s284
        %s286 = sand.u32 %s52, 1
        %s287 = smul.addr %s286, 16
        %s288 = scalar_lea.vmem [#allocation2], %s287
        %p289 = pneg %p65
        %p290 = pneg %p62
        %p291 = pneg %p93
        %p292 = pneg %p90
        %p293 = pneg %p119
        %p294 = pneg %p116
        %p295 = pneg %p145
        %p296 = pneg %p142
        %p297 = pneg %p173
        %p298 = pneg %p170
        %s299 = sand.u32 %s160, 1
        %s300 = scalar_lea.sflag [#allocation4], %s299
        %s301 = sand.u32 %s160, 1
        %s302 = smul.addr %s301, 16
        %s303 = scalar_lea.vmem [#allocation10], %s302
        %s304 = smul.u32 2, %s28
        %s305 = smul.u32 2, %s28
        %v307 = vld [vmem:[%s267] sm:$0xff]
        %v308 = vld [vmem:[%s267 + $0x8] sm:$0xff]
        %v309 = vpack.c.bf16 %v308, %v307
        %v310 = vld [vmem:[#allocation5] sm:$0x3]
        %v311 = vld [vmem:[#allocation7] sm:$0x1]
        %v313 = vlaneseq
        %v314 = vshrl.u32 %v313, 7
        %v315 = vsub.s32 0, %v314
        %v316 = vrot.slane %v311, %v315
        %vm318 = vcmask 31744
        %v320 = vsel %vm318, %v309, 0
        %vm322 = vcmask 1041408
        %v324 = vsel %vm322, %v310, 0
        %326 = vmatprep.subr.bf16.mxu0 0
        %327 = vmatpush1.bf16.msra.mxu0 %v324
        %328 = vmatprep.subr.bf16.mxu0 0
        %329 = vmatpush1.bf16.msra.mxu0 0
        %330 = vmatprep.subr.bf16.mxu0 0
        %331 = vmatpush1.bf16.msra.mxu0 0
        %332 = vmatprep.subr.bf16.mxu0 0
        %333 = vmatpush1.bf16.msra.mxu0 0
        %334 = vmatprep.subr.bf16.mxu0 0
        %335 = vmatpush1.bf16.msra.mxu0 0
        %336 = vmatprep.subr.bf16.mxu0 0
        %337 = vmatpush1.bf16.msra.mxu0 0
        %338 = vmatprep.subr.bf16.mxu0 0
        %339 = vmatpush1.bf16.msra.mxu0 0
        %340 = vmatprep.subr.bf16.mxu0 0
        %341 = vmatpush1.bf16.msra.mxu0 0
        %342 = vmatprep.subr.bf16.mxu0 0
        %343 = vmatpush1.bf16.msra.mxu0 0
        %344 = vmatprep.subr.bf16.mxu0 0
        %345 = vmatpush1.bf16.msra.mxu0 0
        %346 = vmatprep.subr.bf16.mxu0 0
        %347 = vmatpush1.bf16.msra.mxu0 0
        %348 = vmatprep.subr.bf16.mxu0 0
        %349 = vmatpush1.bf16.msra.mxu0 0
        %350 = vmatprep.subr.bf16.mxu0 0
        %351 = vmatpush1.bf16.msra.mxu0 0
        %352 = vmatprep.subr.bf16.mxu0 0
        %353 = vmatpush1.bf16.msra.mxu0 0
        %354 = vmatprep.subr.bf16.mxu0 0
        %355 = vmatpush1.bf16.msra.mxu0 0
        %356 = vmatprep.subr.bf16.mxu0 0
        %357 = vmatpush1.bf16.msra.mxu0 0
        %358 = vmatprep.mubr.bf16.mxu0 0
        %359 = vmatmul.mubr.bf16.gmra.mrb[0].mxu0 %v320
        %v360 = vpop.f32.mrb[0].mxu0
        %v361 = vadd.f32 %v316, %v360
        %v362 = vpop.f32.mrb[0].mxu0
        %v363 = vpop.f32.mrb[0].mxu0
        %v364 = vadd.f32 %v316, %v363
        %v365 = vpop.f32.mrb[0].mxu0
        %366 = vdwg.mxu0
        %v367 = vld [vmem:[#allocation8] sm:$0xff]
        %v368 = vld [vmem:[#allocation8 + $0x8] sm:$0xff]
        %v369 = vadd.f32 %v361, %v367
        %v370 = vadd.f32 %v364, %v368
        %vm371 = vcmask 261120
        %372 = vst.msk [vmem:[%s303] sm:$0xff] %vm371, %v369
        %373 = vst.msk [vmem:[%s303 + $0x8] sm:$0xff] %vm371, %v370
        %s374 = sand.u32 %s160, 1
        %s375 = scalar_lea.sflag [#allocation4], %s374
        %s376 = sand.u32 %s160, 1
        %s377 = smul.addr %s376, 16
        %s378 = scalar_lea.vmem [#allocation10], %s377
        // Predicated region
        $region53: #{tpu_custom_call.1} parent=35 // pred_check
          %p379 = pneg %p170
        $region54: #{tpu_custom_call.1} parent=35 // pred_check_branch
          %381 = sbr.rel (%p379) target = $region56
        $region55: #{tpu_custom_call.1} parent=35 // pred_region
          %s382 = smul.u32 2, %s28
          %s384 = ssub.s32 256, 256
          %385 = vsyncadd %s375, %s384
          %s386 = sadd.s32 %s29, %s382
          %s387 = smul.addr %s386, 128
          %s388 = scalar_lea.hbm %s4, %s387
          %s389 = sshll.u32 %s378, 4
          %s390 = int_to_ptr.vmem [resolvable:$true] %s389
          %395 = dma.vmem_to_hbm [thread:$0]  %s390, 256, %s388, %s375, 128, 128, 8
        $region56: #{tpu_custom_call.1} parent=35 // pred_fallthru
          _
      $region36: #{tpu_custom_call.1} parent=5 // pred_fallthru
        _
      %p396 = scmp.le.s32.totalorder 2, %s18
      // Predicated region
      $region57: #{tpu_custom_call.1} parent=5 // pred_check
        %p397 = pneg %p396
      $region58: #{tpu_custom_call.1} parent=5 // pred_check_branch
        %399 = sbr.rel (%p397) target = $region60
      $region59: #{tpu_custom_call.1} parent=5 // pred_region
        %s400 = ssub.s32 %s18, 2
        // Predicated region
        $region61: #{tpu_custom_call.1} parent=59 // pred_check
          %p401 = pneg %p176
        $region62: #{tpu_custom_call.1} parent=59 // pred_check_branch
          %403 = sbr.rel (%p401) target = $region64
        $region63: #{tpu_custom_call.1} parent=59 // pred_region
          %s404 = sand.u32 %s161, 1
          %s405 = scalar_lea.sflag [#allocation4], %s404
          %s406 = sand.u32 %s161, 1
          %s407 = smul.addr %s406, 16
          %s408 = scalar_lea.vmem [#allocation10], %s407
          %409 = dma.done %s405, 256
        $region64: #{tpu_custom_call.1} parent=59 // pred_fallthru
          _
      $region60: #{tpu_custom_call.1} parent=5 // pred_fallthru
        _
    $region6: #{tpu_custom_call.1} parent=1 // loop_footer
      %s22 = sadd.s32 1, %s18
    $region7: #{tpu_custom_call.1} parent=1 // loop_footer_branch
      %17 = sbr.rel target = $region3
    $region8: #{tpu_custom_call.1} parent=1 // loop_exit
      _
    %410 = vsyncpa [#allocation3], 1
    %s411 = scalar_lea.sflag [#allocation3], 1
    %412 = vsyncpa %s411, 1
    %413 = vsyncpa [#allocation6], 1
    %414 = vsyncpa [#allocation9], 1
    %415 = vsyncpa [#allocation4], 1
    %s416 = scalar_lea.sflag [#allocation4], 1
    %417 = vsyncpa %s416, 1

</llo_original>
